<compile_context>
chip_gen: v7x
topology: tpu7x:2x2x1
jax: 0.10.0
libtpu: 0.0.40
codegen_flags: <defaults>
</compile_context>

<pallas_src>
import jax
import jax.numpy as jnp
from jax.experimental import pallas as pl
from jax.experimental.pallas import tpu as pltpu


def _or_kernel(xrow_ref, xcol_ref, o_ref):
    # xrow_ref: (1, TM, 1)  slice of x along the "i" (row) axis, sublane-major
    # xcol_ref: (1, 1, TN)  slice of x along the "j" (col) axis, lane-major
    # o_ref   : (1, TM, TN) output tile
    #
    # OR(x)[i, j] = 1 - 0.5 * (1 - x_i) * (1 - x_j)
    a = 0.5 * (1.0 - xrow_ref[...].astype(jnp.float32))   # (1, TM, 1)
    c = 1.0 - xcol_ref[...].astype(jnp.float32)           # (1, 1, TN)
    o_ref[...] = (1.0 - a * c).astype(o_ref.dtype)


def _round_down(x: int, m: int) -> int:
    return (x // m) * m


def _round_up(x: int, m: int) -> int:
    return ((x + m - 1) // m) * m


def _select_tiles(N: int, out_itemsize: int, batch: int):
    """Fixed aligned tiles + cdiv grid (no divisor search).

    Returns (TM, TN) for the (1, TM, TN) output block."""
    # Sublane alignment of the output block must match the packed tiling of
    # the output dtype: (8,128) f32, (16,128) bf16, (32,128) int8/fp8.
    align_m = {4: 8, 2: 16, 1: 32}.get(out_itemsize, 8)
    TM_CAP = 512                       # multiple of 8/16/32
    TILE_BUDGET = 8 * 1024 * 1024      # single output-tile bytes (x2 double-buffered)

    # Row (sublane) tile.
    TM = N if N <= TM_CAP else TM_CAP  # full-extent block is always legal

    # Column (lane) tile: keep it a multiple of 128 whenever N allows so stores
    # are long and unmasked; cap by the VMEM budget.
    max_tn = max(128, TILE_BUDGET // max(1, TM * out_itemsize))
    if N <= 128:
        TN = N                                        # full-extent (tiny problem)
    elif N % 128 == 0:
        TN = min(N, _round_down(max_tn, 128))
    else:
        # 128-aligned tile, ragged last block clipped by Pallas on writeback.
        TN = min(_round_down(N, 128), _round_down(max_tn, 128))

    # v7x megacore: make sure there are >= 2 output blocks to shard across TCs.
    if batch * pl.cdiv(N, TM) * pl.cdiv(N, TN) < 2 and N > align_m:
        TM = min(TM, _round_up(pl.cdiv(N, 2), align_m))

    return TM, TN


def or_module(x: jax.Array, out_dtype=None) -> jax.Array:
    """Pallas TPU forward pass of the OR module: (B, N) -> (B, N*N).

    `out_dtype=jnp.bfloat16` halves HBM write traffic (the op is write-bound);
    compute stays in f32 and the cast happens only at the store."""
    B, N = x.shape
    out_dtype = x.dtype if out_dtype is None else jnp.dtype(out_dtype)
    itemsize = jnp.dtype(out_dtype).itemsize

    TM, TN = _select_tiles(N, itemsize, B)
    grid = (B, pl.cdiv(N, TM), pl.cdiv(N, TN))

    # Two views of x: sublane-major row factor, lane-major column factor.
    x_row = x.reshape(B, N, 1)
    x_col = x.reshape(B, 1, N)

    cost = pl.CostEstimate(
        flops=3 * B * N * N,
        transcendentals=0,
        bytes_accessed=B * N * N * itemsize + 2 * B * N * x.dtype.itemsize,
    )

    out = pl.pallas_call(
        _or_kernel,
        out_shape=jax.ShapeDtypeStruct((B, N, N), out_dtype),
        grid_spec=pltpu.PrefetchScalarGridSpec(
            num_scalar_prefetch=0,
            grid=grid,
            in_specs=[
                pl.BlockSpec((1, TM, 1), lambda b, i, j: (b, i, 0)),
                pl.BlockSpec((1, 1, TN), lambda b, i, j: (b, 0, j)),
            ],
            out_specs=pl.BlockSpec((1, TM, TN), lambda b, i, j: (b, i, j)),
        ),
        compiler_params=pltpu.CompilerParams(
            dimension_semantics=("parallel", "parallel", "parallel"),
            vmem_limit_bytes=32 * 1024 * 1024,   # <= 48 MiB cap for v7x headroom
        ),
        cost_estimate=cost,
    )(x_row, x_col)

    # Row-major flatten to (B, N*N) — free reshape, matches `.view(B, -1)`.
    return out.reshape(B, N * N)


def _or_reference(x: jnp.ndarray) -> jnp.ndarray:
    """Pure-JAX reference mirroring the PyTorch module (unfused form)."""
    B, N = x.shape
    xor_out = -(x[:, :, None] * x[:, None, :])                 # (B, N, N)
    y = (x + 1.0) / 2.0
    xor_y = -(y[:, :, None] * y[:, None, :])
    and_out = -xor_y * 2.0 - 1.0
    return (xor_out + and_out + 1.0).reshape(B, -1)


if __name__ == "__main__":
    key = jax.random.PRNGKey(0)
    k1, k2, k3 = jax.random.split(key, 3)

    # Small shape consistent with the module (plain (batch, features) input).
    x_small = jax.random.normal(k1, (2, 8), dtype=jnp.float32)
    out_small = or_module(x_small)
    jax.block_until_ready(out_small)
    assert out_small.shape == (2, 8 * 8), out_small.shape
    assert jnp.allclose(out_small, _or_reference(x_small), atol=1e-5, rtol=1e-5), \
        "mismatch vs reference (small)"

    # Larger shape: N multiple of 128 -> TN == N, one large lane-dense tile per batch.
    x_big = jax.random.normal(k2, (2, 512), dtype=jnp.float32)
    out_big = or_module(x_big)
    jax.block_until_ready(out_big)
    assert out_big.shape == (2, 512 * 512), out_big.shape
    assert jnp.allclose(out_big, _or_reference(x_big), atol=1e-5, rtol=1e-5), \
        "mismatch vs reference (tiled)"

    # Ragged shape: N not a multiple of 128 -> 128-aligned TN with a clipped edge block.
    x_ragged = jax.random.normal(k3, (2, 160), dtype=jnp.float32)
    out_ragged = or_module(x_ragged)
    jax.block_until_ready(out_ragged)
    assert out_ragged.shape == (2, 160 * 160), out_ragged.shape
    assert jnp.allclose(out_ragged, _or_reference(x_ragged), atol=1e-5, rtol=1e-5), \
        "mismatch vs reference (ragged)"

    # bf16 output path: halves HBM write traffic; compute stays f32, cast at store.
    out_bf16 = or_module(x_big, out_dtype=jnp.bfloat16)
    jax.block_until_ready(out_bf16)
    assert out_bf16.dtype == jnp.bfloat16
    assert jnp.allclose(out_bf16.astype(jnp.float32), _or_reference(x_big),
                        atol=0.1, rtol=0.05), "mismatch vs reference (bf16 out)"

    print("KERNEL_OK")
</pallas_src>

<mosaic_0001>
module attributes {stable_mosaic.version = 11 : i64} {
  func.func @_or_kernel(%arg0: i32, %arg1: i32, %arg2: i32, %arg3: memref<1x8x1xf32, #tpu.memory_space<vmem>>, %arg4: memref<1x1x8xf32, #tpu.memory_space<vmem>>, %arg5: memref<1x8x8xf32, #tpu.memory_space<vmem>>) attributes {dimension_semantics = [#tpu.dimension_semantics<parallel>, #tpu.dimension_semantics<parallel>, #tpu.dimension_semantics<parallel>], iteration_bounds = array<i64: 2, 1, 1>, scalar_prefetch = 0 : i64, scratch_operands = 0 : i64, tpu.core_type = #tpu.core_type<tc>, window_params = [{transform_indices = @transform_0, window_bounds = array<i64: 1, 8, 1>}, {transform_indices = @transform_1, window_bounds = array<i64: 1, 1, 8>}, {transform_indices = @transform_2, window_bounds = array<i64: 1, 8, 8>}]} {
    %c0 = arith.constant 0 : index
    %c0_0 = arith.constant 0 : index
    %c0_1 = arith.constant 0 : index
    %0 = vector.load %arg3[%c0, %c0_0, %c0_1] : memref<1x8x1xf32, #tpu.memory_space<vmem>>, vector<1x8x1xf32>
    %cst = arith.constant 1.000000e+00 : f32
    %1 = vector.broadcast %cst : f32 to vector<1x8x1xf32>
    %2 = arith.subf %1, %0 : vector<1x8x1xf32>
    %cst_2 = arith.constant 5.000000e-01 : f32
    %3 = vector.broadcast %cst_2 : f32 to vector<1x8x1xf32>
    %4 = arith.mulf %3, %2 : vector<1x8x1xf32>
    %c0_3 = arith.constant 0 : index
    %c0_4 = arith.constant 0 : index
    %c0_5 = arith.constant 0 : index
    %5 = vector.load %arg4[%c0_3, %c0_4, %c0_5] : memref<1x1x8xf32, #tpu.memory_space<vmem>>, vector<1x1x8xf32>
    %cst_6 = arith.constant 1.000000e+00 : f32
    %6 = vector.broadcast %cst_6 : f32 to vector<1x1x8xf32>
    %7 = arith.subf %6, %5 : vector<1x1x8xf32>
    %8 = vector.broadcast %4 : vector<1x8x1xf32> to vector<1x8x8xf32>
    %9 = vector.broadcast %7 : vector<1x1x8xf32> to vector<1x8x8xf32>
    %10 = arith.mulf %8, %9 : vector<1x8x8xf32>
    %cst_7 = arith.constant 1.000000e+00 : f32
    %11 = vector.broadcast %cst_7 : f32 to vector<1x8x8xf32>
    %12 = arith.subf %11, %10 : vector<1x8x8xf32>
    %c0_8 = arith.constant 0 : index
    %c0_9 = arith.constant 0 : index
    %c0_10 = arith.constant 0 : index
    %13 = vector.load %arg5[%c0_8, %c0_9, %c0_10] : memref<1x8x8xf32, #tpu.memory_space<vmem>>, vector<1x8x8xf32>
    tpu.vector_store %arg5[%c0_8, %c0_9, %c0_10], %12 {strides = array<i32>} : memref<1x8x8xf32, #tpu.memory_space<vmem>>, vector<1x8x8xf32>,
    return
  }
  func.func @transform_0(%arg0: i32, %arg1: i32, %arg2: i32) -> (i32, i32, i32) {
    %c0_i32 = arith.constant 0 : i32
    %c0_i32_0 = arith.constant 0 : i32
    return %arg0, %arg1, %c0_i32 : i32, i32, i32
  }
  func.func @transform_1(%arg0: i32, %arg1: i32, %arg2: i32) -> (i32, i32, i32) {
    %c0_i32 = arith.constant 0 : i32
    %c0_i32_0 = arith.constant 0 : i32
    return %arg0, %c0_i32, %arg2 : i32, i32, i32
  }
  func.func @transform_2(%arg0: i32, %arg1: i32, %arg2: i32) -> (i32, i32, i32) {
    %c0_i32 = arith.constant 0 : i32
    return %arg0, %arg1, %arg2 : i32, i32, i32
  }
}

</mosaic_0001>

<llo_original>
// kernel: tpu_custom_call.1
$region0: #{tpu_custom_call.1}
  #allocation0 [shape = 'u32[]', space=smem, size = 0x4, offset = 0x4, fixed_abs, tag = 'smem constant byte address 0x4 - core index']
  #allocation1 [shape = 'u32[144,128]{1,0:T(1,128)}', space=vmem, size = 0x12000, scoped, tag = 'internal scratch']
  %s0 = inlined_call_operand.vmem [shape: f32[2,8,1], index: 0, kind: input, shape index: {}]
  %s1 = inlined_call_operand.vmem [shape: f32[2,1,8], index: 1, kind: input, shape index: {}]
  %s2 = inlined_call_operand.hbm [shape: f32[2,8,8], index: 2, kind: output, shape index: {}]
  %s3 = sld [smem:[#allocation0]]
  $region41: #{tpu_custom_call.1} parent=0
    _
  %s5 = ssub.s32 1, %s3
  %s6 = scalar_select 0, %s5, %s3
  $region1: #{tpu_custom_call.1} parent=0
    #allocation2 [shape = 'u8[8192]{0}', space=vmem, size = 0x2000, scoped, tag = 'output window, operand 0']
    #allocation3 [shape = 's32[2]{0}', space=sflag, size = 0x8, scoped, tag = 'scoped memory for tpu_custom_call.1']
    %7 = vsyncpa [#allocation3], 0
    %s8 = scalar_lea.sflag [#allocation3], 1
    %9 = vsyncpa %s8, 0
    loop: start=0, step=1, limit=4
    $region2: #{tpu_custom_call.1} parent=1 // loop_pre_header
      _
    $region3: #{tpu_custom_call.1} parent=1 // loop_header
      %s11 = sphi 0, %s15
      %p12 = scmp.ge.s32.totalorder %s11, 4
      %s18 = sphi 0, %s37
      %s19 = sphi 0, %s33
      %s20 = sphi 0, %s29
      %s21 = sphi 0, %s18
      %s22 = sphi 0, %s19
      %s23 = sphi 0, %s20
      %s24 = sphi 0, %s21
      %s25 = sphi 0, %s22
      %s26 = sphi 0, %s23
      %s42 = sphi 0, %s44
      %s45 = sphi 0, %s42
      %s46 = sphi 0, %s45
      %s62 = sphi 0, %s46
      %s70 = sphi 0, %s72
      %s73 = sphi 0, %s70
      %s74 = sphi 0, %s73
      %s90 = sphi 0, %s74
      %s100 = sphi 0, %s102
      %s103 = sphi 0, %s100
      %s104 = sphi 0, %s103
      %s120 = sphi 0, %s104
    $region4: #{tpu_custom_call.1} parent=1 // loop_header_branch
      %14 = sbr.rel (%p12) target = $region8
    $region5: #{tpu_custom_call.1} parent=1 // loop_body
      %s16 = ssub.s32 %s11, 1
      %s17 = ssub.s32 %s11, 2
      %s27 = sadd.s32 1, %s20
      %p28 = scmp.ge.s32.totalorder %s27, 1
      %s29 = scalar_select %p28, 0, %s27
      %s30 = sadd.s32 1, %s19
      %s31 = scalar_select %p28, %s30, %s19
      %p32 = scmp.ge.s32.totalorder %s31, 1
      %s33 = scalar_select %p32, 0, %s31
      %s34 = sadd.s32 1, %s18
      %s35 = scalar_select %p32, %s34, %s18
      %p36 = scmp.ge.s32.totalorder %s35, 2
      %s37 = scalar_select %p36, 0, %s35
      %s38 = ssub.s32 %s18, %s37
      %s39 = ssub.s32 %s19, %s33
      %s40 = sor.u32 %s38, %s39
      %p41 = scmp.eq.s32.totalorder %s40, 0
      %s43 = sadd.s32 %s42, 1
      %s44 = scalar_select %p41, %s42, %s43
      %p47 = pneg %p41
      %p48 = scmp.eq.s32.totalorder %s11, 1
      %p49 = por %p47, %p48
      %p50 = scmp.ne.s32.totalorder %s42, %s45
      %p51 = scmp.eq.s32.totalorder %s11, 0
      %p52 = por %p50, %p51
      %p53 = scmp.ne.s32.totalorder %s42, %s45
      %p54 = scmp.eq.s32.totalorder %s16, 1
      %p55 = por %p53, %p54
      %p56 = scmp.ne.s32.totalorder %s45, %s46
      %p57 = scmp.eq.s32.totalorder %s16, 0
      %p58 = por %p56, %p57
      %p59 = scmp.ne.s32.totalorder %s45, %s46
      %p60 = scmp.eq.s32.totalorder %s17, 1
      %p61 = por %p59, %p60
      %p63 = scmp.ne.s32.totalorder %s46, %s62
      %p64 = scmp.eq.s32.totalorder %s17, 0
      %p65 = por %p63, %p64
      %s66 = ssub.s32 %s18, %s37
      %s67 = ssub.s32 %s20, %s29
      %s68 = sor.u32 %s66, %s67
      %p69 = scmp.eq.s32.totalorder %s68, 0
      %s71 = sadd.s32 %s70, 1
      %s72 = scalar_select %p69, %s70, %s71
      %p75 = pneg %p69
      %p76 = scmp.eq.s32.totalorder %s11, 1
      %p77 = por %p75, %p76
      %p78 = scmp.ne.s32.totalorder %s70, %s73
      %p79 = scmp.eq.s32.totalorder %s11, 0
      %p80 = por %p78, %p79
      %p81 = scmp.ne.s32.totalorder %s70, %s73
      %p82 = scmp.eq.s32.totalorder %s16, 1
      %p83 = por %p81, %p82
      %p84 = scmp.ne.s32.totalorder %s73, %s74
      %p85 = scmp.eq.s32.totalorder %s16, 0
      %p86 = por %p84, %p85
      %p87 = scmp.ne.s32.totalorder %s73, %s74
      %p88 = scmp.eq.s32.totalorder %s17, 1
      %p89 = por %p87, %p88
      %p91 = scmp.ne.s32.totalorder %s74, %s90
      %p92 = scmp.eq.s32.totalorder %s17, 0
      %p93 = por %p91, %p92
      %s94 = ssub.s32 %s18, %s37
      %s95 = ssub.s32 %s19, %s33
      %s96 = sor.u32 %s94, %s95
      %s97 = ssub.s32 %s20, %s29
      %s98 = sor.u32 %s96, %s97
      %p99 = scmp.eq.s32.totalorder %s98, 0
      %s101 = sadd.s32 %s100, 1
      %s102 = scalar_select %p99, %s100, %s101
      %p105 = pneg %p99
      %p106 = scmp.eq.s32.totalorder %s11, 1
      %p107 = por %p105, %p106
      %p108 = scmp.ne.s32.totalorder %s100, %s103
      %p109 = scmp.eq.s32.totalorder %s11, 0
      %p110 = por %p108, %p109
      %p111 = scmp.ne.s32.totalorder %s100, %s103
      %p112 = scmp.eq.s32.totalorder %s16, 1
      %p113 = por %p111, %p112
      %p114 = scmp.ne.s32.totalorder %s103, %s104
      %p115 = scmp.eq.s32.totalorder %s16, 0
      %p116 = por %p114, %p115
      %p117 = scmp.ne.s32.totalorder %s103, %s104
      %p118 = scmp.eq.s32.totalorder %s17, 1
      %p119 = por %p117, %p118
      %p121 = scmp.ne.s32.totalorder %s104, %s120
      %p122 = scmp.eq.s32.totalorder %s17, 0
      %p123 = por %p121, %p122
      %p124 = scmp.le.s32.totalorder 1, %s11
      %p125 = scmp.lt.s32.totalorder %s11, 3
      %p126 = pnand %p124, %p125
      %p127 = pneg %p126
      // Predicated region
      $region9: #{tpu_custom_call.1} parent=5 // pred_check
        _
      $region10: #{tpu_custom_call.1} parent=5 // pred_check_branch
        %129 = sbr.rel (%p126) target = $region12
      $region11: #{tpu_custom_call.1} parent=5 // pred_region
        %s130 = ssub.s32 %s11, 1
      $region12: #{tpu_custom_call.1} parent=5 // pred_fallthru
        _
      %p131 = scmp.lt.s32.totalorder %s11, 2
      // Predicated region
      $region13: #{tpu_custom_call.1} parent=5 // pred_check
        %p132 = pneg %p131
      $region14: #{tpu_custom_call.1} parent=5 // pred_check_branch
        %134 = sbr.rel (%p132) target = $region16
      $region15: #{tpu_custom_call.1} parent=5 // pred_region
        // Predicated region
        $region17: #{tpu_custom_call.1} parent=15 // pred_check
          %p135 = pneg %p52
        $region18: #{tpu_custom_call.1} parent=15 // pred_check_branch
          %137 = sbr.rel (%p135) target = $region20
        $region19: #{tpu_custom_call.1} parent=15 // pred_region
          %p138 = scmp.lt.s32.totalorder %s18, 1
          %s139 = scalar_select %p138, %s18, 1
          %p140 = scmp.lt.s32.totalorder %s19, 0
          %s141 = scalar_select %p140, %s19, 0
          %s142 = sadd.s32 %s141, %s139
          %s143 = smul.addr %s142, 8
          %s144 = scalar_lea.vmem %s0, %s143
        $region20: #{tpu_custom_call.1} parent=15 // pred_fallthru
          _
        // Predicated region
        $region21: #{tpu_custom_call.1} parent=15 // pred_check
          %p145 = pneg %p80
        $region22: #{tpu_custom_call.1} parent=15 // pred_check_branch
          %147 = sbr.rel (%p145) target = $region24
        $region23: #{tpu_custom_call.1} parent=15 // pred_region
          %p148 = scmp.lt.s32.totalorder %s18, 1
          %s149 = scalar_select %p148, %s18, 1
          %p150 = scmp.lt.s32.totalorder %s20, 0
          %s151 = scalar_select %p150, %s20, 0
          %s152 = sadd.s32 %s151, %s149
          %s153 = scalar_lea.vmem %s1, %s152
        $region24: #{tpu_custom_call.1} parent=15 // pred_fallthru
          _
      $region16: #{tpu_custom_call.1} parent=5 // pred_fallthru
        _
      %p154 = scmp.le.s32.totalorder 1, %s11
      %p155 = scmp.lt.s32.totalorder %s11, 3
      %p156 = pnand %p154, %p155
      %p157 = pneg %p156
      // Predicated region
      $region25: #{tpu_custom_call.1} parent=5 // pred_check
        _
      $region26: #{tpu_custom_call.1} parent=5 // pred_check_branch
        %159 = sbr.rel (%p156) target = $region28
      $region27: #{tpu_custom_call.1} parent=5 // pred_region
        %s160 = ssub.s32 %s11, 1
        %p161 = scmp.lt.s32.totalorder %s21, 1
        %s162 = scalar_select %p161, %s21, 1
        %p163 = scmp.lt.s32.totalorder %s22, 0
        %s164 = scalar_select %p163, %s22, 0
        %s165 = sadd.s32 %s164, %s162
        %s166 = smul.addr %s165, 8
        %s167 = scalar_lea.vmem %s0, %s166
        %p168 = pneg %p58
        %p169 = pneg %p55
        %p170 = scmp.lt.s32.totalorder %s21, 1
        %s171 = scalar_select %p170, %s21, 1
        %p172 = scmp.lt.s32.totalorder %s23, 0
        %s173 = scalar_select %p172, %s23, 0
        %s174 = sadd.s32 %s173, %s171
        %s175 = scalar_lea.vmem %s1, %s174
        %p176 = pneg %p86
        %p177 = pneg %p83
        %p178 = pneg %p116
        %p179 = pneg %p113
        %s180 = sand.u32 %s103, 1
        %s181 = scalar_lea.sflag [#allocation3], %s180
        %s182 = sand.u32 %s103, 1
        %s183 = smul.addr %s182, 8
        %s184 = scalar_lea.vmem [#allocation2], %s183
        %p185 = scmp.lt.s32.totalorder %s21, 1
        %s186 = scalar_select %p185, %s21, 1
        %p187 = scmp.lt.s32.totalorder %s22, 0
        %s188 = scalar_select %p187, %s22, 0
        %s189 = sadd.s32 %s188, %s186
        %s190 = smul.addr %s189, 8
        %s191 = scalar_lea.vmem %s0, %s190
        %p192 = scmp.lt.s32.totalorder %s21, 1
        %s193 = scalar_select %p192, %s21, 1
        %p194 = scmp.lt.s32.totalorder %s23, 0
        %s195 = scalar_select %p194, %s23, 0
        %s196 = sadd.s32 %s195, %s193
        %s197 = scalar_lea.vmem %s1, %s196
        %v198 = vld [vmem:[%s191] sm:$0xff]
        %v199 = vsub.f32 1.0, %v198
        %v200 = vmul.f32 %v199, 0.5
        %v201 = vld [vmem:[%s197] sm:$0x1]
        %v202 = vsub.f32 1.0, %v201
        %204 = vset.pattern.permute.xlu0 0
        %205 = vperm.xlu0 %204, %v200
        %v206 = vpop.permute.xlu0 %205
        %v209 = vlaneseq
        %v210 = vshrl.u32 %v209, 7
        %v211 = vsub.s32 0, %v210
        %v212 = vrot.slane %v202, %v211
        %v214 = vmul.f32 %v206, %v212
        %v215 = vsub.f32 1.0, %v214
        %vm216 = vcmask 64512
        %217 = vst.msk [vmem:[%s184] sm:$0xff] %vm216, %v215
        %s218 = sand.u32 %s103, 1
        %s219 = scalar_lea.sflag [#allocation3], %s218
        %s220 = sand.u32 %s103, 1
        %s221 = smul.addr %s220, 8
        %s222 = scalar_lea.vmem [#allocation2], %s221
        // Predicated region
        $region29: #{tpu_custom_call.1} parent=27 // pred_check
          %p223 = pneg %p113
        $region30: #{tpu_custom_call.1} parent=27 // pred_check_branch
          %225 = sbr.rel (%p223) target = $region32
        $region31: #{tpu_custom_call.1} parent=27 // pred_region
          %s227 = ssub.s32 128, 128
          %228 = vsyncadd %s219, %s227
          %s229 = sadd.s32 %s23, %s22
          %s230 = sadd.s32 %s229, %s21
          %s231 = smul.addr %s230, 128
          %s232 = scalar_lea.hbm %s2, %s231
          %s234 = sshll.u32 %s222, 4
          %s235 = int_to_ptr.vmem [resolvable:$true] %s234
          %237 = dma.vmem_to_hbm [thread:$0]  %s235, 128, %s232, %s219
        $region32: #{tpu_custom_call.1} parent=27 // pred_fallthru
          _
      $region28: #{tpu_custom_call.1} parent=5 // pred_fallthru
        _
      %p238 = scmp.le.s32.totalorder 2, %s11
      // Predicated region
      $region33: #{tpu_custom_call.1} parent=5 // pred_check
        %p239 = pneg %p238
      $region34: #{tpu_custom_call.1} parent=5 // pred_check_branch
        %241 = sbr.rel (%p239) target = $region36
      $region35: #{tpu_custom_call.1} parent=5 // pred_region
        %s242 = ssub.s32 %s11, 2
        // Predicated region
        $region37: #{tpu_custom_call.1} parent=35 // pred_check
          %p243 = pneg %p119
        $region38: #{tpu_custom_call.1} parent=35 // pred_check_branch
          %245 = sbr.rel (%p243) target = $region40
        $region39: #{tpu_custom_call.1} parent=35 // pred_region
          %s246 = sand.u32 %s104, 1
          %s247 = scalar_lea.sflag [#allocation3], %s246
          %s248 = sand.u32 %s104, 1
          %s249 = smul.addr %s248, 8
          %s250 = scalar_lea.vmem [#allocation2], %s249
          %251 = dma.done %s247, 128
        $region40: #{tpu_custom_call.1} parent=35 // pred_fallthru
          _
      $region36: #{tpu_custom_call.1} parent=5 // pred_fallthru
        _
    $region6: #{tpu_custom_call.1} parent=1 // loop_footer
      %s15 = sadd.s32 1, %s11
    $region7: #{tpu_custom_call.1} parent=1 // loop_footer_branch
      %10 = sbr.rel target = $region3
    $region8: #{tpu_custom_call.1} parent=1 // loop_exit
      _
    %252 = vsyncpa [#allocation3], 1
    %s253 = scalar_lea.sflag [#allocation3], 1
    %254 = vsyncpa %s253, 1

</llo_original>
